<compile_context>
chip_gen: v7x
topology: tpu7x:2x2x1
jax: 0.10.0
libtpu: 0.0.40
codegen_flags: <defaults>
</compile_context>

<pallas_src>
import jax
import jax.numpy as jnp
from jax.experimental import pallas as pl
from jax.experimental.pallas import tpu as pltpu

SELU_ALPHA = 1.6732632423543772
SELU_SCALE = 1.0507009873554805
LANES = 128
NEG_BIG = -1e30  # finite "minus infinity" so masked * 0 can never produce NaN


def _round8(n):
    return (n + 7) // 8 * 8


def _selu(x):
    return SELU_SCALE * jnp.where(x > 0, x, SELU_ALPHA * (jnp.exp(x) - 1.0))


# ----------------------------------------------------------------------------
# One-time parameter packing (all transposes / padding hoisted out of forward)
# ----------------------------------------------------------------------------
def prepare_params(params, kernel_sizes, num_filter_maps):
    F = num_filter_maps
    nk = len(kernel_sizes)
    K_max = int(max(kernel_sizes))
    embed = jnp.asarray(params["embed"], jnp.float32)            # (V2, E)
    V2, E = embed.shape
    assert nk * F <= LANES

    # Conv weight slab: w_big[j*E + e, c*F + f] = torch_w_c[f, e, j]  (0 if j >= K_c).
    # All branches + taps live in one (K_max*E, 128) matrix -> one MXU call in-kernel.
    w_big = jnp.zeros((K_max * E, LANES), jnp.float32)
    conv_bias = jnp.zeros((LANES,), jnp.float32)
    for c, (w, b) in enumerate(params["convs"]):
        K_c = int(kernel_sizes[c])
        for j in range(K_c):
            w_big = w_big.at[j * E:(j + 1) * E, c * F:(c + 1) * F].set(
                jnp.transpose(w[:, :, j]))
        conv_bias = conv_bias.at[c * F:(c + 1) * F].set(b)

    # Block-diagonal embedding slab: one copy of the table per tap index, so the
    # in-kernel one-hot matmul fetches every tap's token row in a single matmul.
    emb_blk = jnp.zeros((K_max * V2, K_max * E), jnp.float32)
    for j in range(K_max):
        emb_blk = emb_blk.at[j * V2:(j + 1) * V2, j * E:(j + 1) * E].set(embed)

    # Misc-parameter slab (lane-dense, 128 wide):
    #   row 0: packed conv bias                row 1: head weight, conv part
    #   row 2: head weight, FF part            row 3: head bias (lane 0)
    #   rows 4..4+n_ff-1: FF biases            rows >= 8: zero-padded FF weights
    ff_ws = [jnp.transpose(jnp.asarray(w, jnp.float32)) for (w, _) in params["ff"]]
    ff_bs = [jnp.asarray(b, jnp.float32) for (_, b) in params["ff"]]
    n_ff = len(ff_ws)
    dims = tuple([ff_ws[0].shape[0]] + [w.shape[1] for w in ff_ws])  # (Din, H1, .., Hlast)
    assert all(d <= LANES for d in dims[1:])
    assert 4 + n_ff <= 8
    H_last = dims[-1]

    row_starts, r = [], 8
    for l in range(n_ff):
        row_starts.append(r)
        r += _round8(dims[l]) if l == 0 else LANES
    total_rows = _round8(r)

    out_w = jnp.asarray(params["output_w"], jnp.float32).reshape(-1)  # (nk*F + H_last,)
    p_slab = jnp.zeros((total_rows, LANES), jnp.float32)
    p_slab = p_slab.at[0, :].set(conv_bias)
    p_slab = p_slab.at[1, :nk * F].set(out_w[:nk * F])
    p_slab = p_slab.at[2, :H_last].set(out_w[nk * F:])
    p_slab = p_slab.at[3, 0].set(jnp.asarray(params["output_b"], jnp.float32).reshape(()))
    for l in range(n_ff):
        p_slab = p_slab.at[4 + l, :dims[l + 1]].set(ff_bs[l])
        p_slab = p_slab.at[row_starts[l]:row_starts[l] + dims[l], :dims[l + 1]].set(ff_ws[l])

    prep = {"emb_blk": emb_blk, "w_big": w_big, "p_slab": p_slab}
    cfg = dict(kernel_sizes=tuple(int(k) for k in kernel_sizes), F=F, nk=nk,
               K_max=K_max, V2=V2, E=E, dims=dims, n_ff=n_ff,
               row_starts=tuple(row_starts))
    return prep, cfg


# ----------------------------------------------------------------------------
# Fused forward kernel
# ----------------------------------------------------------------------------
def _make_kernel(cfg, B, L):
    ks = cfg["kernel_sizes"]
    F = cfg["F"]
    dims = cfg["dims"]
    n_ff = cfg["n_ff"]
    row_starts = cfg["row_starts"]

    def kernel(ids_ref, xs_ref, t_ref, emb_ref, wbig_ref, p_ref, out_ref):
        BL, KV = ids_ref.shape

        # ---- embedding lookup for every tap: one-hot x block-diag table (1 matmul)
        lane = jax.lax.broadcasted_iota(jnp.int32, (BL, KV), 1)
        onehot = jnp.where(lane == ids_ref[...], 1.0, 0.0)           # (BL, K_max*V2)
        emb_cat = jnp.dot(onehot, emb_ref[...],
                          preferred_element_type=jnp.float32)        # (BL, K_max*E)

        # ---- every conv branch & tap: one 128-lane matmul (shift folded into ids)
        conv = jnp.dot(emb_cat, wbig_ref[...],
                       preferred_element_type=jnp.float32)           # (BL, 128)
        act = _selu(conv + p_ref[0:1, :])                            # + packed bias

        # ---- per-branch valid-length mask, then one max-over-time reduce
        act3 = act.reshape(B, L, LANES)
        t_pos = jax.lax.broadcasted_iota(jnp.int32, (B, L, LANES), 1)
        lane3 = jax.lax.broadcasted_iota(jnp.int32, (B, L, LANES), 2)
        lout = jnp.full((B, L, LANES), L, jnp.int32)
        for c, K_c in enumerate(ks):
            blk = (lane3 >= c * F) & (lane3 < (c + 1) * F)
            lout = jnp.where(blk, L - K_c + 1, lout)
        pooled = jnp.max(jnp.where(t_pos < lout, act3, NEG_BIG), axis=1)  # (B, 128)

        # ---- feed-forward branch on x_struc (ReLU; dropouts identity in eval)
        h = xs_ref[...]
        for l in range(n_ff):
            rows = dims[l] if l == 0 else LANES
            w = p_ref[row_starts[l]:row_starts[l] + rows, :]          # zero-padded
            h = jnp.maximum(
                jnp.dot(h, w, preferred_element_type=jnp.float32) + p_ref[4 + l:5 + l, :],
                0.0)                                                  # (B, 128)

        # ---- output head: one cross-lane reduce over the packed concat
        combined = pooled * p_ref[1:2, :] + h * p_ref[2:3, :]         # (B, 128)
        logit = jnp.sum(combined, axis=-1, keepdims=True)             # (B, 1)
        hb = jnp.sum(p_ref[3:4, :], axis=-1, keepdims=True)           # exact: 1 nonzero
        z = logit + hb

        # ---- stable sigmoid + stable (unweighted) BCE from logits
        e = jnp.exp(-jnp.abs(z))
        y = jnp.where(z >= 0, 1.0 / (1.0 + e), e / (1.0 + e))
        t = t_ref[...]
        per_ex = jnp.maximum(z, 0.0) - z * t + jnp.log(1.0 + e)
        loss = jnp.mean(per_ex)

        # ---- single lane-dense output block: y in rows [0, B), loss in row B
        out_ref[...] = jnp.zeros_like(out_ref)
        out_ref[0:B, :] = jnp.broadcast_to(y, (B, LANES))
        out_ref[B:B + 1, :] = jnp.broadcast_to(loss.reshape(1, 1), (1, LANES))

    return kernel


# ----------------------------------------------------------------------------
# Forward wrapper: tiny integer id preprocessing + one fused pallas_call
# ----------------------------------------------------------------------------
def make_mmnet_forward(cfg):
    K_max, V2, E = cfg["K_max"], cfg["V2"], cfg["E"]
    dims, n_ff = cfg["dims"], cfg["n_ff"]

    def vmem():
        return pl.BlockSpec(memory_space=pltpu.MemorySpace.VMEM)

    @jax.jit
    def forward(prep, x_ids, x_struc, target):
        B, L = x_ids.shape
        BL = B * L
        out_rows = _round8(B + 1)

        # Tap-shifted ids -> per-lane comparison codes for the in-kernel one-hot.
        # ids_cmp[b*L+t, j*V2 + v] = ids[b, min(t+j, L-1)] + j*V2   (clamped taps are
        # masked out in-kernel before the max-over-time, so no cross-batch leakage).
        gidx = jnp.minimum(jnp.arange(L)[:, None] + jnp.arange(K_max)[None, :], L - 1)
        ids_taps = x_ids.astype(jnp.int32)[:, gidx]                        # (B, L, K_max)
        ids_cmp = ids_taps + (jnp.arange(K_max, dtype=jnp.int32) * V2)[None, None, :]
        ids_cmp = jnp.repeat(ids_cmp.reshape(BL, K_max), V2, axis=1)       # (BL, K_max*V2)

        xs = x_struc.astype(jnp.float32)
        t_b1 = target.reshape(B, 1).astype(jnp.float32)

        KV, KE = K_max * V2, K_max * E
        flops = (2 * BL * KV * KE + 2 * BL * KE * LANES
                 + 2 * B * dims[0] * LANES + 2 * B * LANES * LANES * max(n_ff - 1, 0)
                 + 10 * BL * LANES)
        bytes_accessed = 4 * (ids_cmp.size + xs.size + t_b1.size
                              + prep["emb_blk"].size + prep["w_big"].size
                              + prep["p_slab"].size + out_rows * LANES)

        out = pl.pallas_call(
            _make_kernel(cfg, B, L),
            out_shape=jax.ShapeDtypeStruct((out_rows, LANES), jnp.float32),
            in_specs=[vmem()] * 6,
            out_specs=vmem(),
            cost_estimate=pl.CostEstimate(flops=flops,
                                          transcendentals=BL * LANES + 8 * B,
                                          bytes_accessed=bytes_accessed),
        )(ids_cmp, xs, t_b1, prep["emb_blk"], prep["w_big"], prep["p_slab"])
        return out[0:B, 0], out[B, 0]

    return forward


# ----------------------------------------------------------------------------
# Parameter construction (deterministic, synthetic)
# ----------------------------------------------------------------------------
def xavier_uniform(key, shape):
    fan_out, fan_in = shape
    bound = jnp.sqrt(6.0 / (fan_in + fan_out))
    return jax.random.uniform(key, shape, jnp.float32, -bound, bound)


def init_params(key, vocab_size, embed_size, kernel_sizes, num_filter_maps,
                ff_layer_size_list):
    keys = jax.random.split(key, 16)
    params = {}
    params["embed"] = 0.1 * jax.random.normal(
        keys[0], (vocab_size + 2, embed_size), jnp.float32)

    params["convs"] = []
    for i, k in enumerate(kernel_sizes):
        wk = jax.random.split(keys[1], len(kernel_sizes) + 1)[i]
        bound = 1.0 / jnp.sqrt(embed_size * k)
        w = jax.random.uniform(wk, (num_filter_maps, embed_size, k),
                               jnp.float32, -bound, bound)
        b = jax.random.uniform(jax.random.fold_in(wk, 7), (num_filter_maps,),
                               jnp.float32, -bound, bound)
        params["convs"].append((w, b))

    params["ff"] = []
    for i in range(len(ff_layer_size_list) - 1):
        din, dout = ff_layer_size_list[i], ff_layer_size_list[i + 1]
        w = xavier_uniform(jax.random.fold_in(keys[2], i), (dout, din))
        b = jnp.zeros((dout,), jnp.float32)
        params["ff"].append((w, b))

    d_out_in = ff_layer_size_list[-1] + num_filter_maps * len(kernel_sizes)
    params["output_w"] = xavier_uniform(keys[3], (1, d_out_in))
    params["output_b"] = jnp.zeros((1,), jnp.float32)
    return params


# ----------------------------------------------------------------------------
# Pure-JAX reference (independent code path for correctness check)
# ----------------------------------------------------------------------------
def mmnet_reference(params, x_ids, x_struc, target, kernel_sizes):
    x_emb = params["embed"][x_ids]
    outs = []
    for (w, b), k in zip(params["convs"], kernel_sizes):
        B, L, E = x_emb.shape
        Lout = L - k + 1
        conv = jnp.zeros((B, Lout, w.shape[0]), jnp.float32)
        for j in range(k):
            conv = conv + jnp.einsum("ble,fe->blf", x_emb[:, j:j + Lout, :], w[:, :, j])
        conv = conv + b[None, None, :]
        outs.append(jnp.max(jax.nn.selu(conv), axis=1))
    x_conv = jnp.concatenate(outs, axis=1)
    h = x_struc
    for (w, b) in params["ff"]:
        h = jax.nn.relu(h @ w.T + b[None, :])
    x_cat = jnp.concatenate((x_conv, h), axis=1)
    z = (x_cat @ params["output_w"].T + params["output_b"][None, :]).squeeze(-1)
    y = jax.nn.sigmoid(z)
    ll = target * jax.nn.log_sigmoid(z) + (1.0 - target) * jax.nn.log_sigmoid(-z)
    return y, -jnp.mean(ll)


if __name__ == "__main__":
    # Small shapes consistent with the module's forward.
    B, L = 2, 16                 # batch, sequence length
    embed_size = 32
    vocab_size = 50
    kernel_sizes = [3, 4]
    num_filter_maps = 8
    ff_n_input = 16
    ff_layer_size_list = [24, 16]                  # as passed to __init__
    ff_sizes = [ff_n_input] + ff_layer_size_list   # __init__ inserts ff_n_input at 0

    key = jax.random.PRNGKey(0)
    kp, kx, ksx, kt = jax.random.split(key, 4)

    params = init_params(kp, vocab_size, embed_size, kernel_sizes,
                         num_filter_maps, ff_sizes)
    prep, cfg = prepare_params(params, kernel_sizes, num_filter_maps)
    forward = make_mmnet_forward(cfg)

    x_ids = jax.random.randint(kx, (B, L), 0, vocab_size + 2, dtype=jnp.int32)
    x_struc = jax.random.normal(ksx, (B, ff_n_input), jnp.float32)
    target = jax.random.bernoulli(kt, 0.5, (B,)).astype(jnp.float32)

    y, loss = forward(prep, x_ids, x_struc, target)
    y = jax.block_until_ready(y)
    loss = jax.block_until_ready(loss)

    y_ref, loss_ref = mmnet_reference(params, x_ids, x_struc, target, kernel_sizes)
    assert jnp.allclose(y, y_ref, atol=1e-5, rtol=1e-5), (y, y_ref)
    assert jnp.allclose(loss, loss_ref, atol=1e-5, rtol=1e-5), (loss, loss_ref)

    print("KERNEL_OK")
</pallas_src>

<mosaic_0001>
module attributes {stable_mosaic.version = 11 : i64} {
  func.func @kernel(%arg0: memref<32x208xi32, #tpu.memory_space<vmem>>, %arg1: memref<2x16xf32, #tpu.memory_space<vmem>>, %arg2: memref<2x1xf32, #tpu.memory_space<vmem>>, %arg3: memref<208x128xf32, #tpu.memory_space<vmem>>, %arg4: memref<128x128xf32, #tpu.memory_space<vmem>>, %arg5: memref<152x128xf32, #tpu.memory_space<vmem>>, %arg6: memref<8x128xf32, #tpu.memory_space<vmem>>) attributes {dimension_semantics = [], scalar_prefetch = 0 : i64, scratch_operands = 0 : i64, tpu.core_type = #tpu.core_type<tc>} {
    %0 = tpu.iota {dimensions = array<i32: 1>} : vector<32x208xi32>
    %c0 = arith.constant 0 : index
    %c0_0 = arith.constant 0 : index
    %1 = vector.load %arg0[%c0, %c0_0] : memref<32x208xi32, #tpu.memory_space<vmem>>, vector<32x208xi32>
    %2 = arith.cmpi eq, %0, %1 : vector<32x208xi32>
    %cst = arith.constant 1.000000e+00 : f32
    %cst_1 = arith.constant 0.000000e+00 : f32
    %3 = vector.broadcast %cst : f32 to vector<32x208xf32>
    %4 = vector.broadcast %cst_1 : f32 to vector<32x208xf32>
    %5 = arith.select %2, %3, %4 : vector<32x208xi1>, vector<32x208xf32>
    %c0_2 = arith.constant 0 : index
    %c0_3 = arith.constant 0 : index
    %6 = vector.load %arg3[%c0_2, %c0_3] : memref<208x128xf32, #tpu.memory_space<vmem>>, vector<208x128xf32>
    %cst_4 = arith.constant dense<0.000000e+00> : vector<32x128xf32>
    %7 = tpu.matmul %5, %6, %cst_4 {dimension_numbers = #tpu.dot_dimension_numbers<[1], [0], [0], [1], [0, 0, 1, 1], [], []>} : vector<32x208xf32>, vector<208x128xf32>, vector<32x128xf32> -> vector<32x128xf32>
    %c0_5 = arith.constant 0 : index
    %c0_6 = arith.constant 0 : index
    %8 = vector.load %arg4[%c0_5, %c0_6] : memref<128x128xf32, #tpu.memory_space<vmem>>, vector<128x128xf32>
    %cst_7 = arith.constant dense<0.000000e+00> : vector<32x128xf32>
    %9 = tpu.matmul %7, %8, %cst_7 {dimension_numbers = #tpu.dot_dimension_numbers<[1], [0], [0], [1], [0, 0, 1, 1], [], []>} : vector<32x128xf32>, vector<128x128xf32>, vector<32x128xf32> -> vector<32x128xf32>
    %c0_8 = arith.constant 0 : index
    %c0_9 = arith.constant 0 : index
    %10 = vector.load %arg5[%c0_8, %c0_9] : memref<152x128xf32, #tpu.memory_space<vmem>>, vector<1x128xf32>
    %11 = vector.broadcast %10 : vector<1x128xf32> to vector<32x128xf32>
    %12 = arith.addf %9, %11 : vector<32x128xf32>
    %cst_10 = arith.constant 0.000000e+00 : f32
    %13 = vector.broadcast %cst_10 : f32 to vector<32x128xf32>
    %14 = arith.cmpf ogt, %12, %13 : vector<32x128xf32>
    %15 = math.exp %12 : vector<32x128xf32>
    %cst_11 = arith.constant 1.000000e+00 : f32
    %16 = vector.broadcast %cst_11 : f32 to vector<32x128xf32>
    %17 = arith.subf %15, %16 : vector<32x128xf32>
    %cst_12 = arith.constant 1.67326319 : f32
    %18 = vector.broadcast %cst_12 : f32 to vector<32x128xf32>
    %19 = arith.mulf %18, %17 : vector<32x128xf32>
    %20 = arith.select %14, %12, %19 : vector<32x128xi1>, vector<32x128xf32>
    %cst_13 = arith.constant 1.05070102 : f32
    %21 = vector.broadcast %cst_13 : f32 to vector<32x128xf32>
    %22 = arith.mulf %21, %20 : vector<32x128xf32>
    %23 = vector.shape_cast %22 : vector<32x128xf32> to vector<2x16x128xf32>
    %24 = tpu.iota {dimensions = array<i32: 1>} : vector<2x16x128xi32>
    %25 = tpu.iota {dimensions = array<i32: 2>} : vector<2x16x128xi32>
    %c16_i32 = arith.constant 16 : i32
    %26 = vector.broadcast %c16_i32 : i32 to vector<2x16x128xi32>
    %c0_i32 = arith.constant 0 : i32
    %27 = vector.broadcast %c0_i32 : i32 to vector<2x16x128xi32>
    %28 = arith.cmpi sge, %25, %27 : vector<2x16x128xi32>
    %c8_i32 = arith.constant 8 : i32
    %29 = vector.broadcast %c8_i32 : i32 to vector<2x16x128xi32>
    %30 = arith.cmpi slt, %25, %29 : vector<2x16x128xi32>
    %31 = arith.andi %28, %30 : vector<2x16x128xi1>
    %c14_i32 = arith.constant 14 : i32
    %32 = vector.broadcast %c14_i32 : i32 to vector<2x16x128xi32>
    %33 = arith.select %31, %32, %26 : vector<2x16x128xi1>, vector<2x16x128xi32>
    %c8_i32_14 = arith.constant 8 : i32
    %34 = vector.broadcast %c8_i32_14 : i32 to vector<2x16x128xi32>
    %35 = arith.cmpi sge, %25, %34 : vector<2x16x128xi32>
    %c16_i32_15 = arith.constant 16 : i32
    %36 = vector.broadcast %c16_i32_15 : i32 to vector<2x16x128xi32>
    %37 = arith.cmpi slt, %25, %36 : vector<2x16x128xi32>
    %38 = arith.andi %35, %37 : vector<2x16x128xi1>
    %c13_i32 = arith.constant 13 : i32
    %39 = vector.broadcast %c13_i32 : i32 to vector<2x16x128xi32>
    %40 = arith.select %38, %39, %33 : vector<2x16x128xi1>, vector<2x16x128xi32>
    %41 = arith.cmpi slt, %24, %40 : vector<2x16x128xi32>
    %cst_16 = arith.constant -1.000000e+30 : f32
    %42 = vector.broadcast %cst_16 : f32 to vector<2x16x128xf32>
    %43 = arith.select %41, %23, %42 : vector<2x16x128xi1>, vector<2x16x128xf32>
    %cst_17 = arith.constant dense<0xFF800000> : vector<2x128xf32>
    %44 = vector.multi_reduction <maximumf>, %43, %cst_17 [1] : vector<2x16x128xf32> to vector<2x128xf32>
    %c0_18 = arith.constant 0 : index
    %c0_19 = arith.constant 0 : index
    %45 = vector.load %arg1[%c0_18, %c0_19] : memref<2x16xf32, #tpu.memory_space<vmem>>, vector<2x16xf32>
    %c8 = arith.constant 8 : index
    %c0_20 = arith.constant 0 : index
    %46 = vector.load %arg5[%c8, %c0_20] : memref<152x128xf32, #tpu.memory_space<vmem>>, vector<16x128xf32>
    %cst_21 = arith.constant dense<0.000000e+00> : vector<2x128xf32>
    %47 = tpu.matmul %45, %46, %cst_21 {dimension_numbers = #tpu.dot_dimension_numbers<[1], [0], [0], [1], [0, 0, 1, 1], [], []>} : vector<2x16xf32>, vector<16x128xf32>, vector<2x128xf32> -> vector<2x128xf32>
    %c4 = arith.constant 4 : index
    %c0_22 = arith.constant 0 : index
    %48 = vector.load %arg5[%c4, %c0_22] : memref<152x128xf32, #tpu.memory_space<vmem>>, vector<1x128xf32>
    %49 = vector.broadcast %48 : vector<1x128xf32> to vector<2x128xf32>
    %50 = arith.addf %47, %49 : vector<2x128xf32>
    %cst_23 = arith.constant 0.000000e+00 : f32
    %51 = vector.broadcast %cst_23 : f32 to vector<2x128xf32>
    %52 = arith.maximumf %50, %51 : vector<2x128xf32>
    %c24 = arith.constant 24 : index
    %c0_24 = arith.constant 0 : index
    %53 = vector.load %arg5[%c24, %c0_24] : memref<152x128xf32, #tpu.memory_space<vmem>>, vector<128x128xf32>
    %cst_25 = arith.constant dense<0.000000e+00> : vector<2x128xf32>
    %54 = tpu.matmul %52, %53, %cst_25 {dimension_numbers = #tpu.dot_dimension_numbers<[1], [0], [0], [1], [0, 0, 1, 1], [], []>} : vector<2x128xf32>, vector<128x128xf32>, vector<2x128xf32> -> vector<2x128xf32>
    %c5 = arith.constant 5 : index
    %c0_26 = arith.constant 0 : index
    %55 = vector.load %arg5[%c5, %c0_26] : memref<152x128xf32, #tpu.memory_space<vmem>>, vector<1x128xf32>
    %56 = vector.broadcast %55 : vector<1x128xf32> to vector<2x128xf32>
    %57 = arith.addf %54, %56 : vector<2x128xf32>
    %cst_27 = arith.constant 0.000000e+00 : f32
    %58 = vector.broadcast %cst_27 : f32 to vector<2x128xf32>
    %59 = arith.maximumf %57, %58 : vector<2x128xf32>
    %c1 = arith.constant 1 : index
    %c0_28 = arith.constant 0 : index
    %60 = vector.load %arg5[%c1, %c0_28] : memref<152x128xf32, #tpu.memory_space<vmem>>, vector<1x128xf32>
    %61 = vector.broadcast %60 : vector<1x128xf32> to vector<2x128xf32>
    %62 = arith.mulf %44, %61 : vector<2x128xf32>
    %c2 = arith.constant 2 : index
    %c0_29 = arith.constant 0 : index
    %63 = vector.load %arg5[%c2, %c0_29] : memref<152x128xf32, #tpu.memory_space<vmem>>, vector<1x128xf32>
    %64 = vector.broadcast %63 : vector<1x128xf32> to vector<2x128xf32>
    %65 = arith.mulf %59, %64 : vector<2x128xf32>
    %66 = arith.addf %62, %65 : vector<2x128xf32>
    %cst_30 = arith.constant dense<0.000000e+00> : vector<2xf32>
    %67 = vector.multi_reduction <add>, %66, %cst_30 [1] : vector<2x128xf32> to vector<2xf32>
    %68 = vector.shape_cast %67 : vector<2xf32> to vector<2x1xf32>
    %c3 = arith.constant 3 : index
    %c0_31 = arith.constant 0 : index
    %69 = vector.load %arg5[%c3, %c0_31] : memref<152x128xf32, #tpu.memory_space<vmem>>, vector<1x128xf32>
    %cst_32 = arith.constant dense<0.000000e+00> : vector<1xf32>
    %70 = vector.multi_reduction <add>, %69, %cst_32 [1] : vector<1x128xf32> to vector<1xf32>
    %71 = vector.shape_cast %70 : vector<1xf32> to vector<1x1xf32>
    %72 = vector.broadcast %71 : vector<1x1xf32> to vector<2x1xf32>
    %73 = arith.addf %68, %72 : vector<2x1xf32>
    %74 = math.absf %73 : vector<2x1xf32>
    %cst_33 = arith.constant 0.000000e+00 : f32
    %75 = vector.broadcast %cst_33 : f32 to vector<2x1xf32>
    %76 = arith.subf %75, %74 : vector<2x1xf32>
    %77 = math.exp %76 : vector<2x1xf32>
    %cst_34 = arith.constant 0.000000e+00 : f32
    %78 = vector.broadcast %cst_34 : f32 to vector<2x1xf32>
    %79 = arith.cmpf oge, %73, %78 : vector<2x1xf32>
    %cst_35 = arith.constant 1.000000e+00 : f32
    %80 = vector.broadcast %cst_35 : f32 to vector<2x1xf32>
    %81 = arith.addf %80, %77 : vector<2x1xf32>
    %cst_36 = arith.constant 1.000000e+00 : f32
    %82 = vector.broadcast %cst_36 : f32 to vector<2x1xf32>
    %83 = arith.divf %82, %81 : vector<2x1xf32>
    %cst_37 = arith.constant 1.000000e+00 : f32
    %84 = vector.broadcast %cst_37 : f32 to vector<2x1xf32>
    %85 = arith.addf %84, %77 : vector<2x1xf32>
    %86 = arith.divf %77, %85 : vector<2x1xf32>
    %87 = arith.select %79, %83, %86 : vector<2x1xi1>, vector<2x1xf32>
    %c0_38 = arith.constant 0 : index
    %c0_39 = arith.constant 0 : index
    %88 = vector.load %arg2[%c0_38, %c0_39] : memref<2x1xf32, #tpu.memory_space<vmem>>, vector<2x1xf32>
    %cst_40 = arith.constant 0.000000e+00 : f32
    %89 = vector.broadcast %cst_40 : f32 to vector<2x1xf32>
    %90 = arith.maximumf %73, %89 : vector<2x1xf32>
    %91 = arith.mulf %73, %88 : vector<2x1xf32>
    %92 = arith.subf %90, %91 : vector<2x1xf32>
    %cst_41 = arith.constant 1.000000e+00 : f32
    %93 = vector.broadcast %cst_41 : f32 to vector<2x1xf32>
    %94 = arith.addf %93, %77 : vector<2x1xf32>
    %95 = math.log %94 : vector<2x1xf32>
    %96 = arith.addf %92, %95 : vector<2x1xf32>
    %97 = vector.shape_cast %96 : vector<2x1xf32> to vector<1x2x1xf32>
    %cst_42 = arith.constant dense<0.000000e+00> : vector<1xf32>
    %98 = vector.multi_reduction <add>, %97, %cst_42 [1, 2] : vector<1x2x1xf32> to vector<1xf32>
    %99 = vector.shape_cast %98 : vector<1xf32> to vector<1x1x1xf32>
    %100 = vector.extract %99[0, 0, 0] : f32 from vector<1x1x1xf32>
    %cst_43 = arith.constant 2.000000e+00 : f32
    %101 = arith.divf %100, %cst_43 : f32
    %cst_44 = arith.constant 0.000000e+00 : f32
    %102 = vector.broadcast %cst_44 : f32 to vector<8x128xf32>
    %c0_45 = arith.constant 0 : index
    %c0_46 = arith.constant 0 : index
    %103 = vector.load %arg6[%c0_45, %c0_46] : memref<8x128xf32, #tpu.memory_space<vmem>>, vector<8x128xf32>
    tpu.vector_store %arg6[%c0_45, %c0_46], %102 {strides = array<i32>} : memref<8x128xf32, #tpu.memory_space<vmem>>, vector<8x128xf32>,
    %104 = vector.shape_cast %87 : vector<2x1xf32> to vector<2x1xf32>
    %105 = vector.broadcast %104 : vector<2x1xf32> to vector<2x128xf32>
    %c0_47 = arith.constant 0 : index
    %c0_48 = arith.constant 0 : index
    %106 = vector.load %arg6[%c0_47, %c0_48] : memref<8x128xf32, #tpu.memory_space<vmem>>, vector<2x128xf32>
    tpu.vector_store %arg6[%c0_47, %c0_48], %105 {strides = array<i32>} : memref<8x128xf32, #tpu.memory_space<vmem>>, vector<2x128xf32>,
    %107 = vector.broadcast %101 : f32 to vector<1x1xf32>
    %108 = vector.shape_cast %107 : vector<1x1xf32> to vector<1x1xf32>
    %109 = vector.broadcast %108 : vector<1x1xf32> to vector<1x128xf32>
    %c2_49 = arith.constant 2 : index
    %c0_50 = arith.constant 0 : index
    %110 = vector.load %arg6[%c2_49, %c0_50] : memref<8x128xf32, #tpu.memory_space<vmem>>, vector<1x128xf32>
    tpu.vector_store %arg6[%c2_49, %c0_50], %109 {strides = array<i32>} : memref<8x128xf32, #tpu.memory_space<vmem>>, vector<1x128xf32>,
    return
  }
}

</mosaic_0001>

<llo_original>
// kernel: forward.1
$region0: #{forward.1}
  #allocation0 [shape = 'u32[]', space=smem, size = 0x4, offset = 0x4, fixed_abs, tag = 'smem constant byte address 0x4 - core index']
  #allocation1 [shape = 'u32[144,128]{1,0:T(1,128)}', space=vmem, size = 0x12000, scoped, tag = 'internal scratch']
  %s0 = inlined_call_operand.vmem [shape: s32[32,208], index: 0, kind: input, shape index: {}]
  %s1 = inlined_call_operand.vmem [shape: f32[2,16], index: 1, kind: input, shape index: {}]
  %s2 = inlined_call_operand.vmem [shape: f32[2,1], index: 2, kind: input, shape index: {}]
  %s3 = inlined_call_operand.vmem [shape: f32[208,128], index: 3, kind: input, shape index: {}]
  %s4 = inlined_call_operand.vmem [shape: f32[128,128], index: 4, kind: input, shape index: {}]
  %s5 = inlined_call_operand.vmem [shape: f32[152,128], index: 5, kind: input, shape index: {}]
  %s6 = inlined_call_operand.vmem [shape: f32[8,128], index: 6, kind: output, shape index: {}]
  %s7 = sld [smem:[#allocation0]]
  $region34: #{forward.1} parent=0
    _
  %s9 = ssub.s32 1, %s7
  %s10 = scalar_select 0, %s9, %s7
  // Predicated region
  $region2: #{forward.1} parent=0 // pred_check
    _
  $region3: #{forward.1} parent=0 // pred_check_branch
    %12 = sbr.rel (0) target = $region5
  $region4: #{forward.1} parent=0 // pred_region
    _
  $region5: #{forward.1} parent=0 // pred_fallthru
    _
  // Predicated region
  $region6: #{forward.1} parent=0 // pred_check
    _
  $region7: #{forward.1} parent=0 // pred_check_branch
    %14 = sbr.rel (0) target = $region9
  $region8: #{forward.1} parent=0 // pred_region
    _
  $region9: #{forward.1} parent=0 // pred_fallthru
    _
  // Predicated region
  $region10: #{forward.1} parent=0 // pred_check
    _
  $region11: #{forward.1} parent=0 // pred_check_branch
    %16 = sbr.rel (0) target = $region13
  $region12: #{forward.1} parent=0 // pred_region
    _
  $region13: #{forward.1} parent=0 // pred_fallthru
    _
  // Predicated region
  $region14: #{forward.1} parent=0 // pred_check
    _
  $region15: #{forward.1} parent=0 // pred_check_branch
    %18 = sbr.rel (0) target = $region17
  $region16: #{forward.1} parent=0 // pred_region
    _
  $region17: #{forward.1} parent=0 // pred_fallthru
    _
  // Predicated region
  $region18: #{forward.1} parent=0 // pred_check
    _
  $region19: #{forward.1} parent=0 // pred_check_branch
    %20 = sbr.rel (0) target = $region21
  $region20: #{forward.1} parent=0 // pred_region
    _
  $region21: #{forward.1} parent=0 // pred_fallthru
    _
  // Predicated region
  $region22: #{forward.1} parent=0 // pred_check
    _
  $region23: #{forward.1} parent=0 // pred_check_branch
    %22 = sbr.rel (0) target = $region25
  $region24: #{forward.1} parent=0 // pred_region
    _
  $region25: #{forward.1} parent=0 // pred_fallthru
    _
  %v23 = vlaneseq
  %v24 = vand.u32 %v23, 127
  %v25 = vadd.s32 %v24, 128
  %v26 = vld [vmem:[%s0] sm:$0xff]
  %v27 = vld [vmem:[%s0 + $0x8] sm:$0xff]
  %v28 = vld [vmem:[%s0 + $0x10] sm:$0xff]
  %v29 = vld [vmem:[%s0 + $0x18] sm:$0xff]
  %v30 = vld [vmem:[%s0 + $0x20] sm:$0xff]
  %v31 = vld [vmem:[%s0 + $0x28] sm:$0xff]
  %v32 = vld [vmem:[%s0 + $0x30] sm:$0xff]
  %v33 = vld [vmem:[%s0 + $0x38] sm:$0xff]
  %vm34 = vcmp.eq.s32.totalorder %v24, %v26
  %vm35 = vcmp.eq.s32.totalorder %v25, %v27
  %vm36 = vcmp.eq.s32.totalorder %v24, %v28
  %vm37 = vcmp.eq.s32.totalorder %v25, %v29
  %vm38 = vcmp.eq.s32.totalorder %v24, %v30
  %vm39 = vcmp.eq.s32.totalorder %v25, %v31
  %vm40 = vcmp.eq.s32.totalorder %v24, %v32
  %vm41 = vcmp.eq.s32.totalorder %v25, %v33
  %v42 = vsel %vm34, 1.0, 0.0
  %v43 = vsel %vm35, 1.0, 0.0
  %v44 = vsel %vm36, 1.0, 0.0
  %v45 = vsel %vm37, 1.0, 0.0
  %v46 = vsel %vm38, 1.0, 0.0
  %v47 = vsel %vm39, 1.0, 0.0
  %v48 = vsel %vm40, 1.0, 0.0
  %v49 = vsel %vm41, 1.0, 0.0
  %v50 = vld [vmem:[%s3] sm:$0xff]
  %v51 = vld [vmem:[%s3 + $0x8] sm:$0xff]
  %v52 = vld [vmem:[%s3 + $0x10] sm:$0xff]
  %v53 = vld [vmem:[%s3 + $0x18] sm:$0xff]
  %v54 = vld [vmem:[%s3 + $0x20] sm:$0xff]
  %v55 = vld [vmem:[%s3 + $0x28] sm:$0xff]
  %v56 = vld [vmem:[%s3 + $0x30] sm:$0xff]
  %v57 = vld [vmem:[%s3 + $0x38] sm:$0xff]
  %v58 = vld [vmem:[%s3 + $0x40] sm:$0xff]
  %v59 = vld [vmem:[%s3 + $0x48] sm:$0xff]
  %v60 = vld [vmem:[%s3 + $0x50] sm:$0xff]
  %v61 = vld [vmem:[%s3 + $0x58] sm:$0xff]
  %v62 = vld [vmem:[%s3 + $0x60] sm:$0xff]
  %v63 = vld [vmem:[%s3 + $0x68] sm:$0xff]
  %v64 = vld [vmem:[%s3 + $0x70] sm:$0xff]
  %v65 = vld [vmem:[%s3 + $0x78] sm:$0xff]
  %v66 = vld [vmem:[%s3 + $0x80] sm:$0xff]
  %v67 = vld [vmem:[%s3 + $0x88] sm:$0xff]
  %v68 = vld [vmem:[%s3 + $0x90] sm:$0xff]
  %v69 = vld [vmem:[%s3 + $0x98] sm:$0xff]
  %v70 = vld [vmem:[%s3 + $0xa0] sm:$0xff]
  %v71 = vld [vmem:[%s3 + $0xa8] sm:$0xff]
  %v72 = vld [vmem:[%s3 + $0xb0] sm:$0xff]
  %v73 = vld [vmem:[%s3 + $0xb8] sm:$0xff]
  %v74 = vld [vmem:[%s3 + $0xc0] sm:$0xff]
  %v75 = vld [vmem:[%s3 + $0xc8] sm:$0xff]
  %vm76 = vcmask 654336
  %v78 = vsel %vm76, %v43, 0
  %v81 = vsel %vm76, %v45, 0
  %v84 = vsel %vm76, %v47, 0
  %v87 = vsel %vm76, %v49, 0
  %89 = vmatprep.subr.mxu0 0.0
  %90 = vmatpush1.msra.mxu0 %v50
  %91 = vmatprep.subr.mxu0 0.0
  %92 = vmatpush1.msra.mxu0 %v51
  %93 = vmatprep.subr.mxu0 0.0
  %94 = vmatpush1.msra.mxu0 %v52
  %95 = vmatprep.subr.mxu0 0.0
  %96 = vmatpush1.msra.mxu0 %v53
  %97 = vmatprep.subr.mxu0 0.0
  %98 = vmatpush1.msra.mxu0 %v54
  %99 = vmatprep.subr.mxu0 0.0
  %100 = vmatpush1.msra.mxu0 %v55
  %101 = vmatprep.subr.mxu0 0.0
  %102 = vmatpush1.msra.mxu0 %v56
  %103 = vmatprep.subr.mxu0 0.0
  %104 = vmatpush1.msra.mxu0 %v57
  %105 = vmatprep.subr.mxu0 0.0
  %106 = vmatpush1.msra.mxu0 %v58
  %107 = vmatprep.subr.mxu0 0.0
  %108 = vmatpush1.msra.mxu0 %v59
  %109 = vmatprep.subr.mxu0 0.0
  %110 = vmatpush1.msra.mxu0 %v60
  %111 = vmatprep.subr.mxu0 0.0
  %112 = vmatpush1.msra.mxu0 %v61
  %113 = vmatprep.subr.mxu0 0.0
  %114 = vmatpush1.msra.mxu0 %v62
  %115 = vmatprep.subr.mxu0 0.0
  %116 = vmatpush1.msra.mxu0 %v63
  %117 = vmatprep.subr.mxu0 0.0
  %118 = vmatpush1.msra.mxu0 %v64
  %119 = vmatprep.subr.mxu0 0.0
  %120 = vmatpush1.msra.mxu0 %v65
  %121 = vmatprep.subr.mxu0 0.0
  %122 = vmatpush1.msra.mxu0 %v66
  %123 = vmatprep.subr.mxu0 0.0
  %124 = vmatpush1.msra.mxu0 %v67
  %125 = vmatprep.subr.mxu0 0.0
  %126 = vmatpush1.msra.mxu0 %v68
  %127 = vmatprep.subr.mxu0 0.0
  %128 = vmatpush1.msra.mxu0 %v69
  %129 = vmatprep.subr.mxu0 0.0
  %130 = vmatpush1.msra.mxu0 %v70
  %131 = vmatprep.subr.mxu0 0.0
  %132 = vmatpush1.msra.mxu0 %v71
  %133 = vmatprep.subr.mxu0 0.0
  %134 = vmatpush1.msra.mxu0 %v72
  %135 = vmatprep.subr.mxu0 0.0
  %136 = vmatpush1.msra.mxu0 %v73
  %137 = vmatprep.subr.mxu0 0.0
  %138 = vmatpush1.msra.mxu0 %v74
  %139 = vmatprep.subr.mxu0 0.0
  %140 = vmatpush1.msra.mxu0 %v75
  %141 = vmatprep.subr.mxu0 0.0
  %142 = vmatpush1.msra.mxu0 0.0
  %143 = vmatprep.subr.mxu0 0.0
  %144 = vmatpush1.msra.mxu0 0.0
  %145 = vmatprep.subr.mxu0 0.0
  %146 = vmatpush1.msra.mxu0 0.0
  %147 = vmatprep.subr.mxu0 0.0
  %148 = vmatpush1.msra.mxu0 0.0
  %149 = vmatprep.subr.mxu0 0.0
  %150 = vmatpush1.msra.mxu0 0.0
  %151 = vmatprep.subr.mxu0 0.0
  %152 = vmatpush1.msra.mxu0 0.0
  %153 = vmatprep.mubr.f32.mxu0 %v78
  %154 = vmatmul.mubr.f32.gmra.mrb[0].mxu0 %v42
  %v155 = vpop.f32.mrb[0].mxu0
  %v156 = vadd.f32 0.0, %v155
  %v157 = vpop.f32.mrb[0].mxu0
  %158 = vmatprep.mubr.f32.mxu0 %v81
  %159 = vmatmul.mubr.f32.gmra.mrb[0].mxu0 %v44
  %v160 = vpop.f32.mrb[0].mxu0
  %v161 = vadd.f32 0.0, %v160
  %v162 = vpop.f32.mrb[0].mxu0
  %163 = vmatprep.mubr.f32.mxu0 %v84
  %164 = vmatmul.mubr.f32.gmra.mrb[0].mxu0 %v46
  %v165 = vpop.f32.mrb[0].mxu0
  %v166 = vadd.f32 0.0, %v165
  %v167 = vpop.f32.mrb[0].mxu0
  %168 = vmatprep.mubr.f32.mxu0 %v87
  %169 = vmatmul.mubr.f32.gmra.mrb[0].mxu0 %v48
  %v170 = vpop.f32.mrb[0].mxu0
  %v171 = vadd.f32 0.0, %v170
  %v172 = vpop.f32.mrb[0].mxu0
  %173 = vdwg.mxu0
  %v174 = vld [vmem:[%s4] sm:$0xff]
  %v175 = vld [vmem:[%s4 + $0x8] sm:$0xff]
  %v176 = vld [vmem:[%s4 + $0x10] sm:$0xff]
  %v177 = vld [vmem:[%s4 + $0x18] sm:$0xff]
  %v178 = vld [vmem:[%s4 + $0x20] sm:$0xff]
  %v179 = vld [vmem:[%s4 + $0x28] sm:$0xff]
  %v180 = vld [vmem:[%s4 + $0x30] sm:$0xff]
  %v181 = vld [vmem:[%s4 + $0x38] sm:$0xff]
  %v182 = vld [vmem:[%s4 + $0x40] sm:$0xff]
  %v183 = vld [vmem:[%s4 + $0x48] sm:$0xff]
  %v184 = vld [vmem:[%s4 + $0x50] sm:$0xff]
  %v185 = vld [vmem:[%s4 + $0x58] sm:$0xff]
  %v186 = vld [vmem:[%s4 + $0x60] sm:$0xff]
  %v187 = vld [vmem:[%s4 + $0x68] sm:$0xff]
  %v188 = vld [vmem:[%s4 + $0x70] sm:$0xff]
  %v189 = vld [vmem:[%s4 + $0x78] sm:$0xff]
  %v190 = vld [vmem:[%s5] sm:$0x1]
  %v191 = vlaneseq
  %v192 = vshrl.u32 %v191, 7
  %v193 = vsub.s32 0, %v192
  %v194 = vrot.slane %v190, %v193
  %195 = vmatprep.subr.mxu0 0.0
  %196 = vmatpush1.msra.mxu0 %v174
  %197 = vmatprep.subr.mxu0 0.0
  %198 = vmatpush1.msra.mxu0 %v175
  %199 = vmatprep.subr.mxu0 0.0
  %200 = vmatpush1.msra.mxu0 %v176
  %201 = vmatprep.subr.mxu0 0.0
  %202 = vmatpush1.msra.mxu0 %v177
  %203 = vmatprep.subr.mxu0 0.0
  %204 = vmatpush1.msra.mxu0 %v178
  %205 = vmatprep.subr.mxu0 0.0
  %206 = vmatpush1.msra.mxu0 %v179
  %207 = vmatprep.subr.mxu0 0.0
  %208 = vmatpush1.msra.mxu0 %v180
  %209 = vmatprep.subr.mxu0 0.0
  %210 = vmatpush1.msra.mxu0 %v181
  %211 = vmatprep.subr.mxu0 0.0
  %212 = vmatpush1.msra.mxu0 %v182
  %213 = vmatprep.subr.mxu0 0.0
  %214 = vmatpush1.msra.mxu0 %v183
  %215 = vmatprep.subr.mxu0 0.0
  %216 = vmatpush1.msra.mxu0 %v184
  %217 = vmatprep.subr.mxu0 0.0
  %218 = vmatpush1.msra.mxu0 %v185
  %219 = vmatprep.subr.mxu0 0.0
  %220 = vmatpush1.msra.mxu0 %v186
  %221 = vmatprep.subr.mxu0 0.0
  %222 = vmatpush1.msra.mxu0 %v187
  %223 = vmatprep.subr.mxu0 0.0
  %224 = vmatpush1.msra.mxu0 %v188
  %225 = vmatprep.subr.mxu0 0.0
  %226 = vmatpush1.msra.mxu0 %v189
  %227 = vmatprep.subr.mxu0 0.0
  %228 = vmatpush1.msra.mxu0 0.0
  %229 = vmatprep.subr.mxu0 0.0
  %230 = vmatpush1.msra.mxu0 0.0
  %231 = vmatprep.subr.mxu0 0.0
  %232 = vmatpush1.msra.mxu0 0.0
  %233 = vmatprep.subr.mxu0 0.0
  %234 = vmatpush1.msra.mxu0 0.0
  %235 = vmatprep.subr.mxu0 0.0
  %236 = vmatpush1.msra.mxu0 0.0
  %237 = vmatprep.subr.mxu0 0.0
  %238 = vmatpush1.msra.mxu0 0.0
  %239 = vmatprep.subr.mxu0 0.0
  %240 = vmatpush1.msra.mxu0 0.0
  %241 = vmatprep.subr.mxu0 0.0
  %242 = vmatpush1.msra.mxu0 0.0
  %243 = vmatprep.subr.mxu0 0.0
  %244 = vmatpush1.msra.mxu0 0.0
  %245 = vmatprep.subr.mxu0 0.0
  %246 = vmatpush1.msra.mxu0 0.0
  %247 = vmatprep.subr.mxu0 0.0
  %248 = vmatpush1.msra.mxu0 0.0
  %249 = vmatprep.subr.mxu0 0.0
  %250 = vmatpush1.msra.mxu0 0.0
  %251 = vmatprep.subr.mxu0 0.0
  %252 = vmatpush1.msra.mxu0 0.0
  %253 = vmatprep.subr.mxu0 0.0
  %254 = vmatpush1.msra.mxu0 0.0
  %255 = vmatprep.subr.mxu0 0.0
  %256 = vmatpush1.msra.mxu0 0.0
  %257 = vmatprep.subr.mxu0 0.0
  %258 = vmatpush1.msra.mxu0 0.0
  %259 = vmatprep.mubr.f32.mxu0 0.0
  %260 = vmatmul.mubr.f32.gmra.mrb[0].mxu0 %v156
  %v261 = vpop.f32.mrb[0].mxu0
  %v262 = vadd.f32 %v194, %v261
  %v263 = vpop.f32.mrb[0].mxu0
  %264 = vmatprep.mubr.f32.mxu0 0.0
  %265 = vmatmul.mubr.f32.gmra.mrb[0].mxu0 %v161
  %v266 = vpop.f32.mrb[0].mxu0
  %v267 = vadd.f32 %v194, %v266
  %v268 = vpop.f32.mrb[0].mxu0
  %269 = vmatprep.mubr.f32.mxu0 0.0
  %270 = vmatmul.mubr.f32.gmra.mrb[0].mxu0 %v166
  %v271 = vpop.f32.mrb[0].mxu0
  %v272 = vadd.f32 %v194, %v271
  %v273 = vpop.f32.mrb[0].mxu0
  %274 = vmatprep.mubr.f32.mxu0 0.0
  %275 = vmatmul.mubr.f32.gmra.mrb[0].mxu0 %v171
  %v276 = vpop.f32.mrb[0].mxu0
  %v277 = vadd.f32 %v194, %v276
  %v278 = vpop.f32.mrb[0].mxu0
  %279 = vdwg.mxu0
  %vm280 = vcmp.gt.f32.partialorder %v262, 0.0
  %vm281 = vcmp.gt.f32.partialorder %v267, 0.0
  %vm282 = vcmp.gt.f32.partialorder %v272, 0.0
  %vm283 = vcmp.gt.f32.partialorder %v277, 0.0
  %v284 = vmul.f32 %v262, 1.442695
  %v285 = vpow.pop %v284
  %v286 = vmul.f32 %v267, 1.442695
  %v287 = vpow.pop %v286
  %v288 = vmul.f32 %v272, 1.442695
  %v289 = vpow.pop %v288
  %v290 = vmul.f32 %v277, 1.442695
  %v291 = vpow.pop %v290
  %v292 = vsub.f32 %v285, 1.0
  %v293 = vsub.f32 %v287, 1.0
  %v294 = vsub.f32 %v289, 1.0
  %v295 = vsub.f32 %v291, 1.0
  %v296 = vmul.f32 %v292, 1.6732632
  %v297 = vmul.f32 %v293, 1.6732632
  %v298 = vmul.f32 %v294, 1.6732632
  %v299 = vmul.f32 %v295, 1.6732632
  %v300 = vsel %vm280, %v262, %v296
  %v301 = vsel %vm281, %v267, %v297
  %v302 = vsel %vm282, %v272, %v298
  %v303 = vsel %vm283, %v277, %v299
  %v304 = vmul.f32 %v300, 1.050701
  %v305 = vmul.f32 %v301, 1.050701
  %v306 = vmul.f32 %v302, 1.050701
  %v307 = vmul.f32 %v303, 1.050701
  %v308 = vlaneseq
  %v309 = vshrl.u32 %v308, 7
  %v310 = vadd.s32 %v309, 8
  %vm311 = vcmp.ge.s32.totalorder %v24, 0
  %vm312 = vcmp.lt.s32.totalorder %v24, 8
  %vm313 = vmand %vm311, %vm312
  %v314 = vsel %vm313, 14, 16
  %vm315 = vcmp.ge.s32.totalorder %v24, 8
  %vm316 = vcmp.lt.s32.totalorder %v24, 16
  %vm317 = vmand %vm315, %vm316
  %v318 = vsel %vm317, 13, %v314
  %vm319 = vcmp.lt.s32.totalorder %v309, %v318
  %vm320 = vcmp.lt.s32.totalorder %v310, %v318
  %v321 = vsel %vm319, %v304, -1e+30
  %v322 = vsel %vm320, %v305, -1e+30
  %v323 = vsel %vm319, %v306, -1e+30
  %v324 = vsel %vm320, %v307, -1e+30
  %v325 = vmax.f32 %v321, %v322
  %v326 = vrot.slane %v325, 4
  %v327 = vmax.f32 %v325, %v326
  %v328 = vrot.slane %v327, 2
  %v329 = vmax.f32 %v327, %v328
  %v330 = vrot.slane %v329, 1
  %v331 = vmax.f32 %v329, %v330
  %v332 = vmax.f32 %v323, %v324
  %v333 = vrot.slane %v332, 4
  %v334 = vmax.f32 %v332, %v333
  %v335 = vrot.slane %v334, 2
  %v336 = vmax.f32 %v334, %v335
  %v337 = vrot.slane %v336, 1
  %v338 = vmax.f32 %v336, %v337
  %v339 = vld [vmem:[%s1] sm:$0x3]
  %v340 = vld [vmem:[%s5 + $0x8] sm:$0xff]
  %v341 = vld [vmem:[%s5 + $0x10] sm:$0xff]
  %v342 = vld [vmem:[%s5 + $0x4] sm:$0x1]
  %v343 = vlaneseq
  %v344 = vshrl.u32 %v343, 7
  %v345 = vsub.s32 0, %v344
  %v346 = vrot.slane %v342, %v345
  %vm347 = vcmask 130048
  %v349 = vsel %vm347, %v339, 0
  %351 = vmatprep.subr.mxu0 0.0
  %352 = vmatpush1.msra.mxu0 %v340
  %353 = vmatprep.subr.mxu0 0.0
  %354 = vmatpush1.msra.mxu0 %v341
  %355 = vmatprep.subr.mxu0 0.0
  %356 = vmatpush1.msra.mxu0 0.0
  %357 = vmatprep.subr.mxu0 0.0
  %358 = vmatpush1.msra.mxu0 0.0
  %359 = vmatprep.subr.mxu0 0.0
  %360 = vmatpush1.msra.mxu0 0.0
  %361 = vmatprep.subr.mxu0 0.0
  %362 = vmatpush1.msra.mxu0 0.0
  %363 = vmatprep.subr.mxu0 0.0
  %364 = vmatpush1.msra.mxu0 0.0
  %365 = vmatprep.subr.mxu0 0.0
  %366 = vmatpush1.msra.mxu0 0.0
  %367 = vmatprep.subr.mxu0 0.0
  %368 = vmatpush1.msra.mxu0 0.0
  %369 = vmatprep.subr.mxu0 0.0
  %370 = vmatpush1.msra.mxu0 0.0
  %371 = vmatprep.subr.mxu0 0.0
  %372 = vmatpush1.msra.mxu0 0.0
  %373 = vmatprep.subr.mxu0 0.0
  %374 = vmatpush1.msra.mxu0 0.0
  %375 = vmatprep.subr.mxu0 0.0
  %376 = vmatpush1.msra.mxu0 0.0
  %377 = vmatprep.subr.mxu0 0.0
  %378 = vmatpush1.msra.mxu0 0.0
  %379 = vmatprep.subr.mxu0 0.0
  %380 = vmatpush1.msra.mxu0 0.0
  %381 = vmatprep.subr.mxu0 0.0
  %382 = vmatpush1.msra.mxu0 0.0
  %383 = vmatprep.subr.mxu0 0.0
  %384 = vmatpush1.msra.mxu0 0.0
  %385 = vmatprep.subr.mxu0 0.0
  %386 = vmatpush1.msra.mxu0 0.0
  %387 = vmatprep.subr.mxu0 0.0
  %388 = vmatpush1.msra.mxu0 0.0
  %389 = vmatprep.subr.mxu0 0.0
  %390 = vmatpush1.msra.mxu0 0.0
  %391 = vmatprep.subr.mxu0 0.0
  %392 = vmatpush1.msra.mxu0 0.0
  %393 = vmatprep.subr.mxu0 0.0
  %394 = vmatpush1.msra.mxu0 0.0
  %395 = vmatprep.subr.mxu0 0.0
  %396 = vmatpush1.msra.mxu0 0.0
  %397 = vmatprep.subr.mxu0 0.0
  %398 = vmatpush1.msra.mxu0 0.0
  %399 = vmatprep.subr.mxu0 0.0
  %400 = vmatpush1.msra.mxu0 0.0
  %401 = vmatprep.subr.mxu0 0.0
  %402 = vmatpush1.msra.mxu0 0.0
  %403 = vmatprep.subr.mxu0 0.0
  %404 = vmatpush1.msra.mxu0 0.0
  %405 = vmatprep.subr.mxu0 0.0
  %406 = vmatpush1.msra.mxu0 0.0
  %407 = vmatprep.subr.mxu0 0.0
  %408 = vmatpush1.msra.mxu0 0.0
  %409 = vmatprep.subr.mxu0 0.0
  %410 = vmatpush1.msra.mxu0 0.0
  %411 = vmatprep.subr.mxu0 0.0
  %412 = vmatpush1.msra.mxu0 0.0
  %413 = vmatprep.subr.mxu0 0.0
  %414 = vmatpush1.msra.mxu0 0.0
  %415 = vmatprep.mubr.f32.mxu0 0.0
  %416 = vmatmul.mubr.f32.gmra.mrb[0].mxu0 %v349
  %v417 = vpop.f32.mrb[0].mxu0
  %v418 = vadd.f32 %v346, %v417
  %v419 = vpop.f32.mrb[0].mxu0
  %420 = vdwg.mxu0
  %v421 = vmax.f32 %v418, 0.0
  %v422 = vld [vmem:[%s5 + $0x18] sm:$0xff]
  %v423 = vld [vmem:[%s5 + $0x20] sm:$0xff]
  %v424 = vld [vmem:[%s5 + $0x28] sm:$0xff]
  %v425 = vld [vmem:[%s5 + $0x30] sm:$0xff]
  %v426 = vld [vmem:[%s5 + $0x38] sm:$0xff]
  %v427 = vld [vmem:[%s5 + $0x40] sm:$0xff]
  %v428 = vld [vmem:[%s5 + $0x48] sm:$0xff]
  %v429 = vld [vmem:[%s5 + $0x50] sm:$0xff]
  %v430 = vld [vmem:[%s5 + $0x58] sm:$0xff]
  %v431 = vld [vmem:[%s5 + $0x60] sm:$0xff]
  %v432 = vld [vmem:[%s5 + $0x68] sm:$0xff]
  %v433 = vld [vmem:[%s5 + $0x70] sm:$0xff]
  %v434 = vld [vmem:[%s5 + $0x78] sm:$0xff]
  %v435 = vld [vmem:[%s5 + $0x80] sm:$0xff]
  %v436 = vld [vmem:[%s5 + $0x88] sm:$0xff]
  %v437 = vld [vmem:[%s5 + $0x90] sm:$0xff]
  %v438 = vld [vmem:[%s5 + $0x5] sm:$0x1]
  %v439 = vlaneseq
  %v440 = vshrl.u32 %v439, 7
  %v441 = vsub.s32 0, %v440
  %v442 = vrot.slane %v438, %v441
  %443 = vmatprep.subr.mxu0 0.0
  %444 = vmatpush1.msra.mxu0 %v422
  %445 = vmatprep.subr.mxu0 0.0
  %446 = vmatpush1.msra.mxu0 %v423
  %447 = vmatprep.subr.mxu0 0.0
  %448 = vmatpush1.msra.mxu0 %v424
  %449 = vmatprep.subr.mxu0 0.0
  %450 = vmatpush1.msra.mxu0 %v425
  %451 = vmatprep.subr.mxu0 0.0
  %452 = vmatpush1.msra.mxu0 %v426
  %453 = vmatprep.subr.mxu0 0.0
  %454 = vmatpush1.msra.mxu0 %v427
  %455 = vmatprep.subr.mxu0 0.0
  %456 = vmatpush1.msra.mxu0 %v428
  %457 = vmatprep.subr.mxu0 0.0
  %458 = vmatpush1.msra.mxu0 %v429
  %459 = vmatprep.subr.mxu0 0.0
  %460 = vmatpush1.msra.mxu0 %v430
  %461 = vmatprep.subr.mxu0 0.0
  %462 = vmatpush1.msra.mxu0 %v431
  %463 = vmatprep.subr.mxu0 0.0
  %464 = vmatpush1.msra.mxu0 %v432
  %465 = vmatprep.subr.mxu0 0.0
  %466 = vmatpush1.msra.mxu0 %v433
  %467 = vmatprep.subr.mxu0 0.0
  %468 = vmatpush1.msra.mxu0 %v434
  %469 = vmatprep.subr.mxu0 0.0
  %470 = vmatpush1.msra.mxu0 %v435
  %471 = vmatprep.subr.mxu0 0.0
  %472 = vmatpush1.msra.mxu0 %v436
  %473 = vmatprep.subr.mxu0 0.0
  %474 = vmatpush1.msra.mxu0 %v437
  %475 = vmatprep.subr.mxu0 0.0
  %476 = vmatpush1.msra.mxu0 0.0
  %477 = vmatprep.subr.mxu0 0.0
  %478 = vmatpush1.msra.mxu0 0.0
  %479 = vmatprep.subr.mxu0 0.0
  %480 = vmatpush1.msra.mxu0 0.0
  %481 = vmatprep.subr.mxu0 0.0
  %482 = vmatpush1.msra.mxu0 0.0
  %483 = vmatprep.subr.mxu0 0.0
  %484 = vmatpush1.msra.mxu0 0.0
  %485 = vmatprep.subr.mxu0 0.0
  %486 = vmatpush1.msra.mxu0 0.0
  %487 = vmatprep.subr.mxu0 0.0
  %488 = vmatpush1.msra.mxu0 0.0
  %489 = vmatprep.subr.mxu0 0.0
  %490 = vmatpush1.msra.mxu0 0.0
  %491 = vmatprep.subr.mxu0 0.0
  %492 = vmatpush1.msra.mxu0 0.0
  %493 = vmatprep.subr.mxu0 0.0
  %494 = vmatpush1.msra.mxu0 0.0
  %495 = vmatprep.subr.mxu0 0.0
  %496 = vmatpush1.msra.mxu0 0.0
  %497 = vmatprep.subr.mxu0 0.0
  %498 = vmatpush1.msra.mxu0 0.0
  %499 = vmatprep.subr.mxu0 0.0
  %500 = vmatpush1.msra.mxu0 0.0
  %501 = vmatprep.subr.mxu0 0.0
  %502 = vmatpush1.msra.mxu0 0.0
  %503 = vmatprep.subr.mxu0 0.0
  %504 = vmatpush1.msra.mxu0 0.0
  %505 = vmatprep.subr.mxu0 0.0
  %506 = vmatpush1.msra.mxu0 0.0
  %507 = vmatprep.mubr.f32.mxu0 0.0
  %508 = vmatmul.mubr.f32.gmra.mrb[0].mxu0 %v421
  %v509 = vpop.f32.mrb[0].mxu0
  %v510 = vadd.f32 %v442, %v509
  %v511 = vpop.f32.mrb[0].mxu0
  %512 = vdwg.mxu0
  %v513 = vmax.f32 %v510, 0.0
  %v514 = vld [vmem:[%s5 + $0x1] sm:$0x1]
  %v515 = vlaneseq
  %v516 = vshrl.u32 %v515, 7
  %v517 = vsub.s32 0, %v516
  %v518 = vrot.slane %v514, %v517
  %v519 = vmul.f32 %v331, %v518
  %v520 = vmul.f32 %v338, %v518
  %v521 = vld [vmem:[%s5 + $0x2] sm:$0x1]
  %v522 = vlaneseq
  %v523 = vshrl.u32 %v522, 7
  %v524 = vsub.s32 0, %v523
  %v525 = vrot.slane %v521, %v524
  %v526 = vmul.f32 %v513, %v525
  %v528 = vrot.slane %v526, 1
  %v531 = vadd.f32 %v519, %v526
  %v532 = vadd.f32 %v520, %v528
  %v535 = vrot.slane %v532, 7
  %vm536 = vcmask 1041409
  %v537 = vsel %vm536, %v535, %v531
  %vm539 = vcmask 1041408
  %v540 = vsel %vm539, %v537, 0.0
  %541 = vadd.xlane.f32.xlu0 %v540
  %v542 = vpop.xlane.xlu0 %541
  %v543 = vld [vmem:[%s5 + $0x3] sm:$0x1]
  %vm544 = vcmask 1040384
  %v545 = vsel %vm544, %v543, 0.0
  %546 = vadd.xlane.f32.xlu0 %v545
  %v547 = vpop.xlane.xlu0 %546
  %v548 = vlaneseq
  %v549 = vshrl.u32 %v548, 7
  %v550 = vsub.s32 0, %v549
  %v551 = vrot.slane %v547, %v550
  %v552 = vadd.f32 %v542, %v551
  %v553 = vand.u32 2147483647, %v552
  %v554 = vsub.f32 0.0, %v553
  %v555 = vmul.f32 %v554, 1.442695
  %v556 = vpow.pop %v555
  %vm557 = vcmp.ge.f32.partialorder %v552, 0.0
  %v558 = vadd.f32 %v556, 1.0
  %v559 = vrcp.pop %v558
  %v560 = vmul.f32 1.0, %v559
  %v561 = vmul.f32 %v556, %v559
  %v562 = vsel %vm557, %v560, %v561
  %v563 = vld [vmem:[%s2] sm:$0x3]
  %v564 = vmax.f32 %v552, 0.0
  %v565 = vmul.f32 %v552, %v563
  %v566 = vsub.f32 %v564, %v565
  %v567 = vlog2.pop %v558
  %v568 = vmul.f32 %v567, 0.6931472
  %v569 = vadd.f32 %v566, %v568
  %vm570 = vcmask 1024
  %v571 = vsel %vm570, %v569, 0.0
  %572 = vadd.xlane.f32.xlu0 %v571
  %v573 = vpop.xlane.xlu0 %572
  %v574 = vrot.slane %v573, 4
  %v575 = vadd.f32 %v573, %v574
  %v576 = vrot.slane %v575, 2
  %v577 = vadd.f32 %v575, %v576
  %v578 = vrot.slane %v577, 1
  %v579 = vadd.f32 %v577, %v578
  %s580 = vtos %v579
  %v581 = vrcp.pop 2.0
  %s582 = vtos %v581
  %s583 = smul.f32 %s580, %s582
  %584 = vst [vmem:[%s6] sm:$0xff] 0.0
  %585 = vst [vmem:[%s6] sm:$0x3] %v562
  %v586 = vstv %s583
  %587 = vst [vmem:[%s6 + $0x2] sm:$0x1] %v586
  // Predicated region
  $region26: #{forward.1} parent=0 // pred_check
    _
  $region27: #{forward.1} parent=0 // pred_check_branch
    %589 = sbr.rel (0) target = $region29
  $region28: #{forward.1} parent=0 // pred_region
    _
  $region29: #{forward.1} parent=0 // pred_fallthru
    _
  // Predicated region
  $region30: #{forward.1} parent=0 // pred_check
    _
  $region31: #{forward.1} parent=0 // pred_check_branch
    %591 = sbr.rel (0) target = $region33
  $region32: #{forward.1} parent=0 // pred_region
    _
  $region33: #{forward.1} parent=0 // pred_fallthru
    _

</llo_original>
